<compile_context>
chip_gen: v7x
topology: tpu7x:2x2x1
jax: 0.10.0
libtpu: 0.0.40
codegen_flags: <defaults>
</compile_context>

<pallas_src>
import jax
import jax.numpy as jnp
from jax import lax
from jax.experimental import pallas as pl
from jax.experimental.pallas import tpu as pltpu


def autoencoder_kernel(x_ref, wenc_ref, wdec_ref, bdec_ref, benc_ref,
                       enc_ref, l1_ref, mse_ref):
    """Fused forward for one batch tile: encode, decode, per-row L1 / MSE."""
    x = x_ref[...]                               # (TB, n_p) input dtype (bf16)
    xf = x.astype(jnp.float32)
    bdec = bdec_ref[...].astype(jnp.float32)     # (1, n_p)   pre_encoder_bias
    benc = benc_ref[...].astype(jnp.float32)     # (1, m_dim) pre_activation_bias

    # encode: relu((x - b_dec) @ W_enc + b_enc)
    # bf16 operands into the MXU, f32 accumulation.
    xc = (xf - bdec).astype(x_ref.dtype)
    pre = jnp.dot(xc, wenc_ref[...], preferred_element_type=jnp.float32) + benc
    enc_f32 = jnp.maximum(pre, 0.0)
    enc = enc_f32.astype(enc_ref.dtype)          # single bf16 cast, reused below
    enc_ref[...] = enc

    # decode: enc @ W_dec + b_dec (bf16 MXU, f32 accumulation)
    recon = jnp.dot(enc, wdec_ref[...], preferred_element_type=jnp.float32) + bdec

    # Per-row normalized losses (1/n factors of the two means cancel in MSE).
    # NOTE: an all-zero input row yields inf/NaN, matching the PyTorch reference.
    xsq = jnp.sum(xf * xf, axis=-1, keepdims=True)                    # (TB, 1)
    l1_ref[...] = (jnp.sum(jnp.abs(enc_f32), axis=-1, keepdims=True)
                   * lax.rsqrt(xsq))
    err = xf - recon
    mse_ref[...] = (jnp.sum(err * err, axis=-1, keepdims=True)
                    * pl.reciprocal(xsq, approx=True))


def _round_up(x, m):
    return (x + m - 1) // m * m


def _pick_tile_b(batch, cap=256):
    for tb in (512, 256, 128, 64, 32, 16, 8):
        if tb <= cap and batch % tb == 0:
            return tb
    return batch


def _vmem_budget_bytes(tb, n_p, m_dim, itemsize):
    # Double-buffered x / enc tiles + f32 per-row loss rows.
    tiles = 2 * (tb * n_p * itemsize + tb * m_dim * itemsize + 2 * tb * 4)
    # Weights + biases (constant index_map; budget 2x for buffering headroom).
    weights = 2 * (2 * n_p * m_dim + n_p + m_dim) * itemsize
    # f32 temporaries inside the kernel body (xf, pre/enc_f32, recon, err).
    temps = 4 * tb * (2 * n_p + 2 * m_dim)
    budget = tiles + weights + temps + (4 << 20)
    return int(min(max(budget, 16 << 20), 64 << 20))   # stay under v7x physical VMEM


def autoencoder_forward(x, w_enc, w_dec, b_dec, b_enc, lambda_reg=0.001,
                        tile_b=None, mean_over_batch=True):
    """Returns (encoded, loss, l1, mse) like AutoEncoder.forward(x)."""
    B, n_dim = x.shape
    m_dim = w_enc.shape[1]
    itemsize = jnp.dtype(x.dtype).itemsize

    # Lane-pad n_dim to a multiple of 128 (exact: padded lanes are zero everywhere).
    n_p = _round_up(n_dim, 128)
    pad_n = n_p - n_dim
    if pad_n:
        x_p = jnp.pad(x, ((0, 0), (0, pad_n)))
        w_enc_p = jnp.pad(w_enc, ((0, pad_n), (0, 0)))
        w_dec_p = jnp.pad(w_dec, ((0, 0), (0, pad_n)))
        b_dec_p = jnp.pad(b_dec.reshape(1, n_dim), ((0, 0), (0, pad_n)))
    else:
        x_p, w_enc_p, w_dec_p = x, w_enc, w_dec
        b_dec_p = b_dec.reshape(1, n_dim)
    b_enc_p = b_enc.reshape(1, m_dim)

    tb = tile_b if tile_b is not None else _pick_tile_b(B)
    assert B % tb == 0, "batch must be divisible by the batch tile"
    grid = (B // tb,)

    out_shape = (
        jax.ShapeDtypeStruct((B, m_dim), x.dtype),   # encoded
        jax.ShapeDtypeStruct((B, 1), jnp.float32),   # per-row normalized L1
        jax.ShapeDtypeStruct((B, 1), jnp.float32),   # per-row normalized MSE
    )
    enc, l1_rows, mse_rows = pl.pallas_call(
        autoencoder_kernel,
        out_shape=out_shape,
        grid=grid,
        in_specs=[
            pl.BlockSpec((tb, n_p), lambda i: (i, 0)),      # x tile
            pl.BlockSpec((n_p, m_dim), lambda i: (0, 0)),   # W_enc (resident)
            pl.BlockSpec((m_dim, n_p), lambda i: (0, 0)),   # W_dec (resident)
            pl.BlockSpec((1, n_p), lambda i: (0, 0)),       # b_dec
            pl.BlockSpec((1, m_dim), lambda i: (0, 0)),     # b_enc
        ],
        out_specs=(
            pl.BlockSpec((tb, m_dim), lambda i: (i, 0)),
            pl.BlockSpec((tb, 1), lambda i: (i, 0)),
            pl.BlockSpec((tb, 1), lambda i: (i, 0)),
        ),
        compiler_params=pltpu.CompilerParams(
            dimension_semantics=("parallel",),
            vmem_limit_bytes=_vmem_budget_bytes(tb, n_p, m_dim, itemsize),
        ),
    )(x_p, w_enc_p, w_dec_p, b_dec_p, b_enc_p)

    l1_rows = l1_rows[:, 0]
    mse_rows = mse_rows[:, 0]
    if mean_over_batch:
        l1 = jnp.mean(l1_rows)
        mse = jnp.mean(mse_rows)
    else:
        l1, mse = l1_rows, mse_rows
    loss = lambda_reg * l1 + mse
    return enc, loss, l1, mse


def reference_forward(x, w_enc, w_dec, b_dec, b_enc, lambda_reg=0.001):
    """Plain-JAX reference mirroring the (bf16) PyTorch forward."""
    xf = x.astype(jnp.float32)
    xc = (xf - b_dec.astype(jnp.float32)).astype(x.dtype)
    pre = jnp.dot(xc, w_enc, preferred_element_type=jnp.float32) \
        + b_enc.astype(jnp.float32)
    enc_f = jnp.maximum(pre, 0.0)
    enc = enc_f.astype(x.dtype)
    recon = jnp.dot(enc, w_dec, preferred_element_type=jnp.float32) \
        + b_dec.astype(jnp.float32)
    xsq = jnp.sum(xf * xf, axis=-1)
    l1 = jnp.mean(jnp.sum(jnp.abs(enc_f), axis=-1) / jnp.sqrt(xsq))
    mse = jnp.mean(jnp.sum((xf - recon) ** 2, axis=-1) / xsq)
    return enc, lambda_reg * l1 + mse, l1, mse


if __name__ == "__main__":
    # Config-equivalent: n_dim=64, m_dim=256, lambda_reg=0.001, dtype=bfloat16.
    B, n_dim, m_dim = 128, 64, 256
    lambda_reg = 0.001
    dtype = jnp.bfloat16

    key = jax.random.PRNGKey(0)
    kx, ke, kd = jax.random.split(key, 3)
    x = jax.random.normal(kx, (B, n_dim), dtype=jnp.float32).astype(dtype)
    # nn.Linear-style init: U(-1/sqrt(fan_in), 1/sqrt(fan_in))
    w_enc = (jax.random.uniform(ke, (n_dim, m_dim), minval=-1.0, maxval=1.0)
             / jnp.sqrt(n_dim)).astype(dtype)          # == encoder.weight.T
    w_dec = (jax.random.uniform(kd, (m_dim, n_dim), minval=-1.0, maxval=1.0)
             / jnp.sqrt(m_dim)).astype(dtype)          # == decoder.weight.T
    b_dec = jnp.zeros((n_dim,), dtype=dtype)           # pre_encoder_bias
    b_enc = jnp.zeros((m_dim,), dtype=dtype)           # pre_activation_bias

    enc, loss, l1, mse = autoencoder_forward(
        x, w_enc, w_dec, b_dec, b_enc, lambda_reg=lambda_reg)
    jax.block_until_ready((enc, loss, l1, mse))

    enc_r, loss_r, l1_r, mse_r = reference_forward(
        x, w_enc, w_dec, b_dec, b_enc, lambda_reg=lambda_reg)

    assert enc.shape == (B, m_dim)
    assert jnp.allclose(enc.astype(jnp.float32), enc_r.astype(jnp.float32),
                        atol=1e-2, rtol=1e-2)
    assert jnp.allclose(l1, l1_r, atol=5e-3, rtol=5e-3)
    assert jnp.allclose(mse, mse_r, atol=5e-3, rtol=5e-3)
    assert jnp.allclose(loss, loss_r, atol=5e-3, rtol=5e-3)

    print("KERNEL_OK")
</pallas_src>

<mosaic_0001>
module attributes {stable_mosaic.version = 11 : i64} {
  func.func @autoencoder_kernel(%arg0: i32, %arg1: memref<128x128xbf16, #tpu.memory_space<vmem>>, %arg2: memref<128x256xbf16, #tpu.memory_space<vmem>>, %arg3: memref<256x128xbf16, #tpu.memory_space<vmem>>, %arg4: memref<1x128xbf16, #tpu.memory_space<vmem>>, %arg5: memref<1x256xbf16, #tpu.memory_space<vmem>>, %arg6: memref<128x256xbf16, #tpu.memory_space<vmem>>, %arg7: memref<128x1xf32, #tpu.memory_space<vmem>>, %arg8: memref<128x1xf32, #tpu.memory_space<vmem>>) attributes {dimension_semantics = [#tpu.dimension_semantics<parallel>], iteration_bounds = array<i64: 1>, scalar_prefetch = 0 : i64, scratch_operands = 0 : i64, tpu.core_type = #tpu.core_type<tc>, window_params = [{transform_indices = @transform_0, window_bounds = array<i64: 128, 128>}, {pipeline_mode = #tpu.pipeline_mode<synchronous>, transform_indices = @transform_1, window_bounds = array<i64: 128, 256>}, {pipeline_mode = #tpu.pipeline_mode<synchronous>, transform_indices = @transform_2, window_bounds = array<i64: 256, 128>}, {pipeline_mode = #tpu.pipeline_mode<synchronous>, transform_indices = @transform_3, window_bounds = array<i64: 1, 128>}, {pipeline_mode = #tpu.pipeline_mode<synchronous>, transform_indices = @transform_4, window_bounds = array<i64: 1, 256>}, {transform_indices = @transform_5, window_bounds = array<i64: 128, 256>}, {transform_indices = @transform_6, window_bounds = array<i64: 128, 1>}, {transform_indices = @transform_7, window_bounds = array<i64: 128, 1>}]} {
    %c0 = arith.constant 0 : index
    %c0_0 = arith.constant 0 : index
    %0 = vector.load %arg1[%c0, %c0_0] : memref<128x128xbf16, #tpu.memory_space<vmem>>, vector<128x128xbf16>
    %1 = arith.extf %0 : vector<128x128xbf16> to vector<128x128xf32>
    %c0_1 = arith.constant 0 : index
    %c0_2 = arith.constant 0 : index
    %2 = vector.load %arg4[%c0_1, %c0_2] : memref<1x128xbf16, #tpu.memory_space<vmem>>, vector<1x128xbf16>
    %3 = arith.extf %2 : vector<1x128xbf16> to vector<1x128xf32>
    %c0_3 = arith.constant 0 : index
    %c0_4 = arith.constant 0 : index
    %4 = vector.load %arg5[%c0_3, %c0_4] : memref<1x256xbf16, #tpu.memory_space<vmem>>, vector<1x256xbf16>
    %5 = arith.extf %4 : vector<1x256xbf16> to vector<1x256xf32>
    %6 = vector.broadcast %3 : vector<1x128xf32> to vector<128x128xf32>
    %7 = arith.subf %1, %6 : vector<128x128xf32>
    %8 = arith.truncf %7 : vector<128x128xf32> to vector<128x128xbf16>
    %c0_5 = arith.constant 0 : index
    %c0_6 = arith.constant 0 : index
    %9 = vector.load %arg2[%c0_5, %c0_6] : memref<128x256xbf16, #tpu.memory_space<vmem>>, vector<128x256xbf16>
    %cst = arith.constant dense<0.000000e+00> : vector<128x256xf32>
    %10 = tpu.matmul %8, %9, %cst {dimension_numbers = #tpu.dot_dimension_numbers<[1], [0], [0], [1], [0, 0, 1, 1], [], []>} : vector<128x128xbf16>, vector<128x256xbf16>, vector<128x256xf32> -> vector<128x256xf32>
    %11 = vector.broadcast %5 : vector<1x256xf32> to vector<128x256xf32>
    %12 = arith.addf %10, %11 : vector<128x256xf32>
    %cst_7 = arith.constant 0.000000e+00 : f32
    %13 = vector.broadcast %cst_7 : f32 to vector<128x256xf32>
    %14 = arith.maximumf %12, %13 : vector<128x256xf32>
    %15 = arith.truncf %14 : vector<128x256xf32> to vector<128x256xbf16>
    %c0_8 = arith.constant 0 : index
    %c0_9 = arith.constant 0 : index
    %16 = vector.load %arg6[%c0_8, %c0_9] : memref<128x256xbf16, #tpu.memory_space<vmem>>, vector<128x256xbf16>
    tpu.vector_store %arg6[%c0_8, %c0_9], %15 {strides = array<i32>} : memref<128x256xbf16, #tpu.memory_space<vmem>>, vector<128x256xbf16>,
    %c0_10 = arith.constant 0 : index
    %c0_11 = arith.constant 0 : index
    %17 = vector.load %arg3[%c0_10, %c0_11] : memref<256x128xbf16, #tpu.memory_space<vmem>>, vector<256x128xbf16>
    %cst_12 = arith.constant dense<0.000000e+00> : vector<128x128xf32>
    %18 = tpu.matmul %15, %17, %cst_12 {dimension_numbers = #tpu.dot_dimension_numbers<[1], [0], [0], [1], [0, 0, 1, 1], [], []>} : vector<128x256xbf16>, vector<256x128xbf16>, vector<128x128xf32> -> vector<128x128xf32>
    %19 = vector.broadcast %3 : vector<1x128xf32> to vector<128x128xf32>
    %20 = arith.addf %18, %19 : vector<128x128xf32>
    %21 = arith.mulf %1, %1 : vector<128x128xf32>
    %cst_13 = arith.constant dense<0.000000e+00> : vector<128xf32>
    %22 = vector.multi_reduction <add>, %21, %cst_13 [1] : vector<128x128xf32> to vector<128xf32>
    %23 = vector.shape_cast %22 : vector<128xf32> to vector<128x1xf32>
    %24 = math.absf %14 : vector<128x256xf32>
    %cst_14 = arith.constant dense<0.000000e+00> : vector<128xf32>
    %25 = vector.multi_reduction <add>, %24, %cst_14 [1] : vector<128x256xf32> to vector<128xf32>
    %26 = vector.shape_cast %25 : vector<128xf32> to vector<128x1xf32>
    %27 = math.rsqrt %23 : vector<128x1xf32>
    %28 = arith.mulf %26, %27 : vector<128x1xf32>
    %c0_15 = arith.constant 0 : index
    %c0_16 = arith.constant 0 : index
    %29 = vector.load %arg7[%c0_15, %c0_16] : memref<128x1xf32, #tpu.memory_space<vmem>>, vector<128x1xf32>
    tpu.vector_store %arg7[%c0_15, %c0_16], %28 {strides = array<i32>} : memref<128x1xf32, #tpu.memory_space<vmem>>, vector<128x1xf32>,
    %30 = arith.subf %1, %20 : vector<128x128xf32>
    %31 = arith.mulf %30, %30 : vector<128x128xf32>
    %cst_17 = arith.constant dense<0.000000e+00> : vector<128xf32>
    %32 = vector.multi_reduction <add>, %31, %cst_17 [1] : vector<128x128xf32> to vector<128xf32>
    %33 = vector.shape_cast %32 : vector<128xf32> to vector<128x1xf32>
    %34 = tpu.reciprocal %23 {approx = true} : vector<128x1xf32> -> vector<128x1xf32>
    %35 = arith.mulf %33, %34 : vector<128x1xf32>
    %c0_18 = arith.constant 0 : index
    %c0_19 = arith.constant 0 : index
    %36 = vector.load %arg8[%c0_18, %c0_19] : memref<128x1xf32, #tpu.memory_space<vmem>>, vector<128x1xf32>
    tpu.vector_store %arg8[%c0_18, %c0_19], %35 {strides = array<i32>} : memref<128x1xf32, #tpu.memory_space<vmem>>, vector<128x1xf32>,
    return
  }
  func.func @transform_0(%arg0: i32) -> (i32, i32) {
    %c0_i32 = arith.constant 0 : i32
    %c0_i32_0 = arith.constant 0 : i32
    return %arg0, %c0_i32 : i32, i32
  }
  func.func @transform_1(%arg0: i32) -> (i32, i32) {
    %c0_i32 = arith.constant 0 : i32
    %c0_i32_0 = arith.constant 0 : i32
    %c0_i32_1 = arith.constant 0 : i32
    return %c0_i32, %c0_i32_0 : i32, i32
  }
  func.func @transform_2(%arg0: i32) -> (i32, i32) {
    %c0_i32 = arith.constant 0 : i32
    %c0_i32_0 = arith.constant 0 : i32
    %c0_i32_1 = arith.constant 0 : i32
    return %c0_i32, %c0_i32_0 : i32, i32
  }
  func.func @transform_3(%arg0: i32) -> (i32, i32) {
    %c0_i32 = arith.constant 0 : i32
    %c0_i32_0 = arith.constant 0 : i32
    %c0_i32_1 = arith.constant 0 : i32
    return %c0_i32, %c0_i32_0 : i32, i32
  }
  func.func @transform_4(%arg0: i32) -> (i32, i32) {
    %c0_i32 = arith.constant 0 : i32
    %c0_i32_0 = arith.constant 0 : i32
    %c0_i32_1 = arith.constant 0 : i32
    return %c0_i32, %c0_i32_0 : i32, i32
  }
  func.func @transform_5(%arg0: i32) -> (i32, i32) {
    %c0_i32 = arith.constant 0 : i32
    %c0_i32_0 = arith.constant 0 : i32
    return %arg0, %c0_i32 : i32, i32
  }
  func.func @transform_6(%arg0: i32) -> (i32, i32) {
    %c0_i32 = arith.constant 0 : i32
    %c0_i32_0 = arith.constant 0 : i32
    return %arg0, %c0_i32 : i32, i32
  }
  func.func @transform_7(%arg0: i32) -> (i32, i32) {
    %c0_i32 = arith.constant 0 : i32
    %c0_i32_0 = arith.constant 0 : i32
    return %arg0, %c0_i32 : i32, i32
  }
}

</mosaic_0001>

<llo_original>
// kernel: tpu_custom_call.1
$region0: #{tpu_custom_call.1}
  #allocation0 [shape = 'u32[]', space=smem, size = 0x4, offset = 0x4, fixed_abs, tag = 'smem constant byte address 0x4 - core index']
  #allocation1 [shape = 'u32[144,128]{1,0:T(1,128)}', space=vmem, size = 0x12000, scoped, tag = 'internal scratch']
  %s0 = inlined_call_operand.hbm [shape: bf16[128,128], index: 0, kind: input, shape index: {}]
  %s1 = inlined_call_operand.hbm [shape: bf16[128,256], index: 1, kind: input, shape index: {}]
  %s2 = inlined_call_operand.hbm [shape: bf16[256,128], index: 2, kind: input, shape index: {}]
  %s3 = inlined_call_operand.vmem [shape: bf16[1,128], index: 3, kind: input, shape index: {}]
  %s4 = inlined_call_operand.vmem [shape: bf16[1,256], index: 4, kind: input, shape index: {}]
  %s5 = inlined_call_operand.hbm [shape: bf16[128,256], index: 5, kind: output, shape index: {0}]
  %s6 = inlined_call_operand.vmem [shape: f32[128,1], index: 6, kind: output, shape index: {1}]
  %s7 = inlined_call_operand.vmem [shape: f32[128,1], index: 7, kind: output, shape index: {2}]
  %8 = xla_tuple %s5, %s6, %s7
  %s9 = sld [smem:[#allocation0]]
  $region58: #{tpu_custom_call.1} parent=0
    _
  %s11 = ssub.s32 1, %s9
  %s12 = scalar_select 0, %s11, %s9
  $region1: #{tpu_custom_call.1} parent=0
    #allocation2 [shape = 'u8[32768]{0}', space=vmem, size = 0x8000, scoped, tag = 'input window, operand 0, single buffered']
    #allocation3 [shape = 's32[1]{0}', space=sflag, size = 0x4, scoped, tag = 'scoped memory for tpu_custom_call.1']
    #allocation4 [shape = 's32[1]{0}', space=sflag, size = 0x4, scoped, tag = 'scoped memory for tpu_custom_call.1']
    #allocation5 [shape = 'u8[65536]{0}', space=vmem, size = 0x10000, scoped, tag = 'input window, operand 1, single buffered']
    #allocation6 [shape = 's32[1]{0}', space=sflag, size = 0x4, scoped, tag = 'scoped memory for tpu_custom_call.1']
    #allocation7 [shape = 'u8[65536]{0}', space=vmem, size = 0x10000, scoped, tag = 'input window, operand 2, single buffered']
    #allocation8 [shape = 'u8[65536]{0}', space=vmem, size = 0x10000, scoped, tag = 'output window, operand 0, single buffered']
    %13 = vsyncpa [#allocation3], 0
    %14 = vsyncpa [#allocation6], 0
    %15 = vsyncpa [#allocation4], 0
    // Predicated region
    $region2: #{tpu_custom_call.1} parent=1 // pred_check
      _
    $region3: #{tpu_custom_call.1} parent=1 // pred_check_branch
      %17 = sbr.rel (0) target = $region5
    $region4: #{tpu_custom_call.1} parent=1 // pred_region
      %s19 = ssub.s32 1024, 1024
      %20 = vsyncadd [#allocation3], %s19
      %s21 = sshll.u32 [#allocation2], 4
      %s22 = int_to_ptr.vmem [resolvable:$true] %s21
      %27 = dma.hbm_to_vmem [thread:$0]  %s0, 1024, %s22, [#allocation3], 64, 64, 4
    $region5: #{tpu_custom_call.1} parent=1 // pred_fallthru
      _
    // Predicated region
    $region6: #{tpu_custom_call.1} parent=1 // pred_check
      _
    $region7: #{tpu_custom_call.1} parent=1 // pred_check_branch
      %29 = sbr.rel (0) target = $region9
    $region8: #{tpu_custom_call.1} parent=1 // pred_region
      %s31 = ssub.s32 2048, 2048
      %32 = vsyncadd [#allocation6], %s31
      %s33 = sshll.u32 [#allocation5], 4
      %s34 = int_to_ptr.vmem [resolvable:$true] %s33
      %39 = dma.hbm_to_vmem [thread:$0]  %s1, 2048, %s34, [#allocation6], 128, 128, 8
    $region9: #{tpu_custom_call.1} parent=1 // pred_fallthru
      _
    // Predicated region
    $region10: #{tpu_custom_call.1} parent=1 // pred_check
      _
    $region11: #{tpu_custom_call.1} parent=1 // pred_check_branch
      %41 = sbr.rel (0) target = $region13
    $region12: #{tpu_custom_call.1} parent=1 // pred_region
      %s43 = ssub.s32 2048, 2048
      %44 = vsyncadd [#allocation6], %s43
      %s45 = sshll.u32 [#allocation7], 4
      %s46 = int_to_ptr.vmem [resolvable:$true] %s45
      %51 = dma.hbm_to_vmem [thread:$0]  %s2, 2048, %s46, [#allocation6], 64, 64, 4
    $region13: #{tpu_custom_call.1} parent=1 // pred_fallthru
      _
    // Predicated region
    $region14: #{tpu_custom_call.1} parent=1 // pred_check
      _
    $region15: #{tpu_custom_call.1} parent=1 // pred_check_branch
      %53 = sbr.rel (0) target = $region17
    $region16: #{tpu_custom_call.1} parent=1 // pred_region
      _
    $region17: #{tpu_custom_call.1} parent=1 // pred_fallthru
      _
    // Predicated region
    $region18: #{tpu_custom_call.1} parent=1 // pred_check
      _
    $region19: #{tpu_custom_call.1} parent=1 // pred_check_branch
      %55 = sbr.rel (0) target = $region21
    $region20: #{tpu_custom_call.1} parent=1 // pred_region
      _
    $region21: #{tpu_custom_call.1} parent=1 // pred_fallthru
      _
    // Predicated region
    $region22: #{tpu_custom_call.1} parent=1 // pred_check
      _
    $region23: #{tpu_custom_call.1} parent=1 // pred_check_branch
      %57 = sbr.rel (0) target = $region25
    $region24: #{tpu_custom_call.1} parent=1 // pred_region
      %58 = dma.done [#allocation3], 1024
    $region25: #{tpu_custom_call.1} parent=1 // pred_fallthru
      _
    // Predicated region
    $region26: #{tpu_custom_call.1} parent=1 // pred_check
      _
    $region27: #{tpu_custom_call.1} parent=1 // pred_check_branch
      %60 = sbr.rel (0) target = $region29
    $region28: #{tpu_custom_call.1} parent=1 // pred_region
      %61 = dma.done [#allocation6], 2048
    $region29: #{tpu_custom_call.1} parent=1 // pred_fallthru
      _
    // Predicated region
    $region30: #{tpu_custom_call.1} parent=1 // pred_check
      _
    $region31: #{tpu_custom_call.1} parent=1 // pred_check_branch
      %63 = sbr.rel (0) target = $region33
    $region32: #{tpu_custom_call.1} parent=1 // pred_region
      %64 = dma.done [#allocation6], 2048
    $region33: #{tpu_custom_call.1} parent=1 // pred_fallthru
      _
    %v66 = vld [vmem:[#allocation2] sm:$0xf]
    %v67 = vld [vmem:[#allocation2 + $0x4] sm:$0xf]
    %v68 = vld [vmem:[#allocation2 + $0x8] sm:$0xf]
    %v69 = vld [vmem:[#allocation2 + $0xc] sm:$0xf]
    %v70 = vld [vmem:[#allocation2 + $0x10] sm:$0xf]
    %v71 = vld [vmem:[#allocation2 + $0x14] sm:$0xf]
    %v72 = vld [vmem:[#allocation2 + $0x18] sm:$0xf]
    %v73 = vld [vmem:[#allocation2 + $0x1c] sm:$0xf]
    %v74 = vld [vmem:[#allocation2 + $0x20] sm:$0xf]
    %v75 = vld [vmem:[#allocation2 + $0x24] sm:$0xf]
    %v76 = vld [vmem:[#allocation2 + $0x28] sm:$0xf]
    %v77 = vld [vmem:[#allocation2 + $0x2c] sm:$0xf]
    %v78 = vld [vmem:[#allocation2 + $0x30] sm:$0xf]
    %v79 = vld [vmem:[#allocation2 + $0x34] sm:$0xf]
    %v80 = vld [vmem:[#allocation2 + $0x38] sm:$0xf]
    %v81 = vld [vmem:[#allocation2 + $0x3c] sm:$0xf]
    %v82 = vunpack.c.l.bf16 %v66
    %v83 = vunpack.c.l.bf16 %v67
    %v84 = vunpack.c.l.bf16 %v68
    %v85 = vunpack.c.l.bf16 %v69
    %v86 = vunpack.c.l.bf16 %v70
    %v87 = vunpack.c.l.bf16 %v71
    %v88 = vunpack.c.l.bf16 %v72
    %v89 = vunpack.c.l.bf16 %v73
    %v90 = vunpack.c.l.bf16 %v74
    %v91 = vunpack.c.l.bf16 %v75
    %v92 = vunpack.c.l.bf16 %v76
    %v93 = vunpack.c.l.bf16 %v77
    %v94 = vunpack.c.l.bf16 %v78
    %v95 = vunpack.c.l.bf16 %v79
    %v96 = vunpack.c.l.bf16 %v80
    %v97 = vunpack.c.l.bf16 %v81
    %v98 = vld [vmem:[%s3] sm:$0x1]
    %v99 = vunpack.c.l.bf16 %v98
    %v100 = vld [vmem:[%s4] sm:$0x3]
    %v101 = vunpack.c.l.bf16 %v100
    %v102 = vlaneseq
    %v103 = vshrl.u32 %v102, 7
    %v104 = vsub.s32 0, %v103
    %v105 = vrot.slane %v99, %v104
    %v106 = vsub.f32 %v82, %v105
    %v107 = vsub.f32 %v83, %v105
    %v108 = vsub.f32 %v84, %v105
    %v109 = vsub.f32 %v85, %v105
    %v110 = vsub.f32 %v86, %v105
    %v111 = vsub.f32 %v87, %v105
    %v112 = vsub.f32 %v88, %v105
    %v113 = vsub.f32 %v89, %v105
    %v114 = vsub.f32 %v90, %v105
    %v115 = vsub.f32 %v91, %v105
    %v116 = vsub.f32 %v92, %v105
    %v117 = vsub.f32 %v93, %v105
    %v118 = vsub.f32 %v94, %v105
    %v119 = vsub.f32 %v95, %v105
    %v120 = vsub.f32 %v96, %v105
    %v121 = vsub.f32 %v97, %v105
    %v122 = vpack.c.bf16 %v107, %v106
    %v123 = vpack.c.bf16 %v109, %v108
    %v124 = vpack.c.bf16 %v111, %v110
    %v125 = vpack.c.bf16 %v113, %v112
    %v126 = vpack.c.bf16 %v115, %v114
    %v127 = vpack.c.bf16 %v117, %v116
    %v128 = vpack.c.bf16 %v119, %v118
    %v129 = vpack.c.bf16 %v121, %v120
    %v130 = vld [vmem:[#allocation5] sm:$0xff]
    %v131 = vld [vmem:[#allocation5 + $0x8] sm:$0xff]
    %v132 = vld [vmem:[#allocation5 + $0x10] sm:$0xff]
    %v133 = vld [vmem:[#allocation5 + $0x18] sm:$0xff]
    %v134 = vld [vmem:[#allocation5 + $0x20] sm:$0xff]
    %v135 = vld [vmem:[#allocation5 + $0x28] sm:$0xff]
    %v136 = vld [vmem:[#allocation5 + $0x30] sm:$0xff]
    %v137 = vld [vmem:[#allocation5 + $0x38] sm:$0xff]
    %v138 = vld [vmem:[#allocation5 + $0x40] sm:$0xff]
    %v139 = vld [vmem:[#allocation5 + $0x48] sm:$0xff]
    %v140 = vld [vmem:[#allocation5 + $0x50] sm:$0xff]
    %v141 = vld [vmem:[#allocation5 + $0x58] sm:$0xff]
    %v142 = vld [vmem:[#allocation5 + $0x60] sm:$0xff]
    %v143 = vld [vmem:[#allocation5 + $0x68] sm:$0xff]
    %v144 = vld [vmem:[#allocation5 + $0x70] sm:$0xff]
    %v145 = vld [vmem:[#allocation5 + $0x78] sm:$0xff]
    %v147 = vlaneseq
    %v148 = vshrl.u32 %v147, 7
    %v149 = vsub.s32 0, %v148
    %v150 = vrot.slane %v101, %v149
    %v151 = vlaneseq
    %v152 = vshrl.u32 %v151, 7
    %v153 = vsub.s32 2, %v152
    %v154 = vrot.slane %v101, %v153
    %v157 = vlaneseq
    %v158 = vshrl.u32 %v157, 7
    %v159 = vsub.s32 0, %v158
    %v160 = vrot.slane %v150, %v159
    %v161 = vlaneseq
    %v162 = vshrl.u32 %v161, 7
    %v163 = vsub.s32 0, %v162
    %v164 = vrot.slane %v154, %v163
    %v181 = vunpack.c.l.b16 %v130
    %v182 = vunpack.c.h.b16 %v130
    %v183 = vunpack.c.l.b16 %v131
    %v184 = vunpack.c.h.b16 %v131
    %v185 = vunpack.c.l.b16 %v132
    %v186 = vunpack.c.h.b16 %v132
    %v187 = vunpack.c.l.b16 %v133
    %v188 = vunpack.c.h.b16 %v133
    %v189 = vunpack.c.l.b16 %v134
    %v190 = vunpack.c.h.b16 %v134
    %v191 = vunpack.c.l.b16 %v135
    %v192 = vunpack.c.h.b16 %v135
    %v193 = vunpack.c.l.b16 %v136
    %v194 = vunpack.c.h.b16 %v136
    %v195 = vunpack.c.l.b16 %v137
    %v196 = vunpack.c.h.b16 %v137
    %v197 = vunpack.c.l.b16 %v138
    %v198 = vunpack.c.h.b16 %v138
    %v199 = vunpack.c.l.b16 %v139
    %v200 = vunpack.c.h.b16 %v139
    %v201 = vunpack.c.l.b16 %v140
    %v202 = vunpack.c.h.b16 %v140
    %v203 = vunpack.c.l.b16 %v141
    %v204 = vunpack.c.h.b16 %v141
    %v205 = vunpack.c.l.b16 %v142
    %v206 = vunpack.c.h.b16 %v142
    %v207 = vunpack.c.l.b16 %v143
    %v208 = vunpack.c.h.b16 %v143
    %v209 = vunpack.c.l.b16 %v144
    %v210 = vunpack.c.h.b16 %v144
    %v211 = vunpack.c.l.b16 %v145
    %v212 = vunpack.c.h.b16 %v145
    %v213 = vpack.c.b16 %v183, %v181
    %v214 = vpack.c.b16 %v184, %v182
    %v215 = vpack.c.b16 %v187, %v185
    %v216 = vpack.c.b16 %v188, %v186
    %v217 = vpack.c.b16 %v191, %v189
    %v218 = vpack.c.b16 %v192, %v190
    %v219 = vpack.c.b16 %v195, %v193
    %v220 = vpack.c.b16 %v196, %v194
    %v221 = vpack.c.b16 %v199, %v197
    %v222 = vpack.c.b16 %v200, %v198
    %v223 = vpack.c.b16 %v203, %v201
    %v224 = vpack.c.b16 %v204, %v202
    %v225 = vpack.c.b16 %v207, %v205
    %v226 = vpack.c.b16 %v208, %v206
    %v227 = vpack.c.b16 %v211, %v209
    %v228 = vpack.c.b16 %v212, %v210
    %245 = vmatprep.subr.bf16.mxu0 %v214
    %246 = vmatpush1.bf16.msra.mxu0 %v213
    %247 = vmatprep.subr.bf16.mxu0 %v216
    %248 = vmatpush1.bf16.msra.mxu0 %v215
    %249 = vmatprep.subr.bf16.mxu0 %v218
    %250 = vmatpush1.bf16.msra.mxu0 %v217
    %251 = vmatprep.subr.bf16.mxu0 %v220
    %252 = vmatpush1.bf16.msra.mxu0 %v219
    %253 = vmatprep.subr.bf16.mxu0 %v222
    %254 = vmatpush1.bf16.msra.mxu0 %v221
    %255 = vmatprep.subr.bf16.mxu0 %v224
    %256 = vmatpush1.bf16.msra.mxu0 %v223
    %257 = vmatprep.subr.bf16.mxu0 %v226
    %258 = vmatpush1.bf16.msra.mxu0 %v225
    %259 = vmatprep.subr.bf16.mxu0 %v228
    %260 = vmatpush1.bf16.msra.mxu0 %v227
    %261 = vmatprep.subr.bf16.mxu0 0
    %262 = vmatpush1.bf16.msra.mxu0 0
    %263 = vmatprep.subr.bf16.mxu0 0
    %264 = vmatpush1.bf16.msra.mxu0 0
    %265 = vmatprep.subr.bf16.mxu0 0
    %266 = vmatpush1.bf16.msra.mxu0 0
    %267 = vmatprep.subr.bf16.mxu0 0
    %268 = vmatpush1.bf16.msra.mxu0 0
    %269 = vmatprep.subr.bf16.mxu0 0
    %270 = vmatpush1.bf16.msra.mxu0 0
    %271 = vmatprep.subr.bf16.mxu0 0
    %272 = vmatpush1.bf16.msra.mxu0 0
    %273 = vmatprep.subr.bf16.mxu0 0
    %274 = vmatpush1.bf16.msra.mxu0 0
    %275 = vmatprep.subr.bf16.mxu0 0
    %276 = vmatpush1.bf16.msra.mxu0 0
    %277 = vmatprep.mubr.bf16.mxu0 0
    %278 = vmatmul.mubr.bf16.gmra.mrb[0].mxu0 %v122
    %v279 = vpop.f32.mrb[0].mxu0
    %v280 = vadd.f32 %v160, %v279
    %v281 = vpop.f32.mrb[0].mxu0
    %v282 = vadd.f32 %v164, %v281
    %v283 = vpop.f32.mrb[0].mxu0
    %v284 = vadd.f32 %v160, %v283
    %v285 = vpop.f32.mrb[0].mxu0
    %v286 = vadd.f32 %v164, %v285
    %287 = vmatprep.mubr.bf16.mxu0 0
    %288 = vmatmul.mubr.bf16.gmra.mrb[0].mxu0 %v123
    %v289 = vpop.f32.mrb[0].mxu0
    %v290 = vadd.f32 %v160, %v289
    %v291 = vpop.f32.mrb[0].mxu0
    %v292 = vadd.f32 %v164, %v291
    %v293 = vpop.f32.mrb[0].mxu0
    %v294 = vadd.f32 %v160, %v293
    %v295 = vpop.f32.mrb[0].mxu0
    %v296 = vadd.f32 %v164, %v295
    %297 = vmatprep.mubr.bf16.mxu0 0
    %298 = vmatmul.mubr.bf16.gmra.mrb[0].mxu0 %v124
    %v299 = vpop.f32.mrb[0].mxu0
    %v300 = vadd.f32 %v160, %v299
    %v301 = vpop.f32.mrb[0].mxu0
    %v302 = vadd.f32 %v164, %v301
    %v303 = vpop.f32.mrb[0].mxu0
    %v304 = vadd.f32 %v160, %v303
    %v305 = vpop.f32.mrb[0].mxu0
    %v306 = vadd.f32 %v164, %v305
    %307 = vmatprep.mubr.bf16.mxu0 0
    %308 = vmatmul.mubr.bf16.gmra.mrb[0].mxu0 %v125
    %v309 = vpop.f32.mrb[0].mxu0
    %v310 = vadd.f32 %v160, %v309
    %v311 = vpop.f32.mrb[0].mxu0
    %v312 = vadd.f32 %v164, %v311
    %v313 = vpop.f32.mrb[0].mxu0
    %v314 = vadd.f32 %v160, %v313
    %v315 = vpop.f32.mrb[0].mxu0
    %v316 = vadd.f32 %v164, %v315
    %317 = vmatprep.mubr.bf16.mxu0 0
    %318 = vmatmul.mubr.bf16.gmra.mrb[0].mxu0 %v126
    %v319 = vpop.f32.mrb[0].mxu0
    %v320 = vadd.f32 %v160, %v319
    %v321 = vpop.f32.mrb[0].mxu0
    %v322 = vadd.f32 %v164, %v321
    %v323 = vpop.f32.mrb[0].mxu0
    %v324 = vadd.f32 %v160, %v323
    %v325 = vpop.f32.mrb[0].mxu0
    %v326 = vadd.f32 %v164, %v325
    %327 = vmatprep.mubr.bf16.mxu0 0
    %328 = vmatmul.mubr.bf16.gmra.mrb[0].mxu0 %v127
    %v329 = vpop.f32.mrb[0].mxu0
    %v330 = vadd.f32 %v160, %v329
    %v331 = vpop.f32.mrb[0].mxu0
    %v332 = vadd.f32 %v164, %v331
    %v333 = vpop.f32.mrb[0].mxu0
    %v334 = vadd.f32 %v160, %v333
    %v335 = vpop.f32.mrb[0].mxu0
    %v336 = vadd.f32 %v164, %v335
    %337 = vmatprep.mubr.bf16.mxu0 0
    %338 = vmatmul.mubr.bf16.gmra.mrb[0].mxu0 %v128
    %v339 = vpop.f32.mrb[0].mxu0
    %v340 = vadd.f32 %v160, %v339
    %v341 = vpop.f32.mrb[0].mxu0
    %v342 = vadd.f32 %v164, %v341
    %v343 = vpop.f32.mrb[0].mxu0
    %v344 = vadd.f32 %v160, %v343
    %v345 = vpop.f32.mrb[0].mxu0
    %v346 = vadd.f32 %v164, %v345
    %347 = vmatprep.mubr.bf16.mxu0 0
    %348 = vmatmul.mubr.bf16.gmra.mrb[0].mxu0 %v129
    %v349 = vpop.f32.mrb[0].mxu0
    %v350 = vadd.f32 %v160, %v349
    %v351 = vpop.f32.mrb[0].mxu0
    %v352 = vadd.f32 %v164, %v351
    %v353 = vpop.f32.mrb[0].mxu0
    %v354 = vadd.f32 %v160, %v353
    %v355 = vpop.f32.mrb[0].mxu0
    %v356 = vadd.f32 %v164, %v355
    %357 = vdwg.mxu0
    %v358 = vmax.f32 %v280, 0.0
    %v359 = vmax.f32 %v282, 0.0
    %v360 = vmax.f32 %v284, 0.0
    %v361 = vmax.f32 %v286, 0.0
    %v362 = vmax.f32 %v290, 0.0
    %v363 = vmax.f32 %v292, 0.0
    %v364 = vmax.f32 %v294, 0.0
    %v365 = vmax.f32 %v296, 0.0
    %v366 = vmax.f32 %v300, 0.0
    %v367 = vmax.f32 %v302, 0.0
    %v368 = vmax.f32 %v304, 0.0
    %v369 = vmax.f32 %v306, 0.0
    %v370 = vmax.f32 %v310, 0.0
    %v371 = vmax.f32 %v312, 0.0
    %v372 = vmax.f32 %v314, 0.0
    %v373 = vmax.f32 %v316, 0.0
    %v374 = vmax.f32 %v320, 0.0
    %v375 = vmax.f32 %v322, 0.0
    %v376 = vmax.f32 %v324, 0.0
    %v377 = vmax.f32 %v326, 0.0
    %v378 = vmax.f32 %v330, 0.0
    %v379 = vmax.f32 %v332, 0.0
    %v380 = vmax.f32 %v334, 0.0
    %v381 = vmax.f32 %v336, 0.0
    %v382 = vmax.f32 %v340, 0.0
    %v383 = vmax.f32 %v342, 0.0
    %v384 = vmax.f32 %v344, 0.0
    %v385 = vmax.f32 %v346, 0.0
    %v386 = vmax.f32 %v350, 0.0
    %v387 = vmax.f32 %v352, 0.0
    %v388 = vmax.f32 %v354, 0.0
    %v389 = vmax.f32 %v356, 0.0
    %v390 = vpack.c.bf16 %v360, %v358
    %v391 = vpack.c.bf16 %v361, %v359
    %v392 = vpack.c.bf16 %v364, %v362
    %v393 = vpack.c.bf16 %v365, %v363
    %v394 = vpack.c.bf16 %v368, %v366
    %v395 = vpack.c.bf16 %v369, %v367
    %v396 = vpack.c.bf16 %v372, %v370
    %v397 = vpack.c.bf16 %v373, %v371
    %v398 = vpack.c.bf16 %v376, %v374
    %v399 = vpack.c.bf16 %v377, %v375
    %v400 = vpack.c.bf16 %v380, %v378
    %v401 = vpack.c.bf16 %v381, %v379
    %v402 = vpack.c.bf16 %v384, %v382
    %v403 = vpack.c.bf16 %v385, %v383
    %v404 = vpack.c.bf16 %v388, %v386
    %v405 = vpack.c.bf16 %v389, %v387
    %v422 = vunpack.c.l.b16 %v390
    %v423 = vunpack.c.l.b16 %v391
    %v424 = vunpack.c.h.b16 %v390
    %v425 = vunpack.c.h.b16 %v391
    %v426 = vunpack.c.l.b16 %v392
    %v427 = vunpack.c.l.b16 %v393
    %v428 = vunpack.c.h.b16 %v392
    %v429 = vunpack.c.h.b16 %v393
    %v430 = vunpack.c.l.b16 %v394
    %v431 = vunpack.c.l.b16 %v395
    %v432 = vunpack.c.h.b16 %v394
    %v433 = vunpack.c.h.b16 %v395
    %v434 = vunpack.c.l.b16 %v396
    %v435 = vunpack.c.l.b16 %v397
    %v436 = vunpack.c.h.b16 %v396
    %v437 = vunpack.c.h.b16 %v397
    %v438 = vunpack.c.l.b16 %v398
    %v439 = vunpack.c.l.b16 %v399
    %v440 = vunpack.c.h.b16 %v398
    %v441 = vunpack.c.h.b16 %v399
    %v442 = vunpack.c.l.b16 %v400
    %v443 = vunpack.c.l.b16 %v401
    %v444 = vunpack.c.h.b16 %v400
    %v445 = vunpack.c.h.b16 %v401
    %v446 = vunpack.c.l.b16 %v402
    %v447 = vunpack.c.l.b16 %v403
    %v448 = vunpack.c.h.b16 %v402
    %v449 = vunpack.c.h.b16 %v403
    %v450 = vunpack.c.l.b16 %v404
    %v451 = vunpack.c.l.b16 %v405
    %v452 = vunpack.c.h.b16 %v404
    %v453 = vunpack.c.h.b16 %v405
    %v454 = vpack.c.b16 %v423, %v422
    %v455 = vpack.c.b16 %v425, %v424
    %v456 = vpack.c.b16 %v427, %v426
    %v457 = vpack.c.b16 %v429, %v428
    %v458 = vpack.c.b16 %v431, %v430
    %v459 = vpack.c.b16 %v433, %v432
    %v460 = vpack.c.b16 %v435, %v434
    %v461 = vpack.c.b16 %v437, %v436
    %v462 = vpack.c.b16 %v439, %v438
    %v463 = vpack.c.b16 %v441, %v440
    %v464 = vpack.c.b16 %v443, %v442
    %v465 = vpack.c.b16 %v445, %v444
    %v466 = vpack.c.b16 %v447, %v446
    %v467 = vpack.c.b16 %v449, %v448
    %v468 = vpack.c.b16 %v451, %v450
    %v469 = vpack.c.b16 %v453, %v452
    %486 = vst [vmem:[#allocation8] sm:$0xff] %v454
    %487 = vst [vmem:[#allocation8 + $0x8] sm:$0xff] %v455
    %488 = vst [vmem:[#allocation8 + $0x10] sm:$0xff] %v456
    %489 = vst [vmem:[#allocation8 + $0x18] sm:$0xff] %v457
    %490 = vst [vmem:[#allocation8 + $0x20] sm:$0xff] %v458
    %491 = vst [vmem:[#allocation8 + $0x28] sm:$0xff] %v459
    %492 = vst [vmem:[#allocation8 + $0x30] sm:$0xff] %v460
    %493 = vst [vmem:[#allocation8 + $0x38] sm:$0xff] %v461
    %494 = vst [vmem:[#allocation8 + $0x40] sm:$0xff] %v462
    %495 = vst [vmem:[#allocation8 + $0x48] sm:$0xff] %v463
    %496 = vst [vmem:[#allocation8 + $0x50] sm:$0xff] %v464
    %497 = vst [vmem:[#allocation8 + $0x58] sm:$0xff] %v465
    %498 = vst [vmem:[#allocation8 + $0x60] sm:$0xff] %v466
    %499 = vst [vmem:[#allocation8 + $0x68] sm:$0xff] %v467
    %500 = vst [vmem:[#allocation8 + $0x70] sm:$0xff] %v468
    %501 = vst [vmem:[#allocation8 + $0x78] sm:$0xff] %v469
    %v502 = vld [vmem:[#allocation7] sm:$0xf]
    %v503 = vld [vmem:[#allocation7 + $0x4] sm:$0xf]
    %v504 = vld [vmem:[#allocation7 + $0x8] sm:$0xf]
    %v505 = vld [vmem:[#allocation7 + $0xc] sm:$0xf]
    %v506 = vld [vmem:[#allocation7 + $0x10] sm:$0xf]
    %v507 = vld [vmem:[#allocation7 + $0x14] sm:$0xf]
    %v508 = vld [vmem:[#allocation7 + $0x18] sm:$0xf]
    %v509 = vld [vmem:[#allocation7 + $0x1c] sm:$0xf]
    %v510 = vld [vmem:[#allocation7 + $0x20] sm:$0xf]
    %v511 = vld [vmem:[#allocation7 + $0x24] sm:$0xf]
    %v512 = vld [vmem:[#allocation7 + $0x28] sm:$0xf]
    %v513 = vld [vmem:[#allocation7 + $0x2c] sm:$0xf]
    %v514 = vld [vmem:[#allocation7 + $0x30] sm:$0xf]
    %v515 = vld [vmem:[#allocation7 + $0x34] sm:$0xf]
    %v516 = vld [vmem:[#allocation7 + $0x38] sm:$0xf]
    %v517 = vld [vmem:[#allocation7 + $0x3c] sm:$0xf]
    %v518 = vld [vmem:[#allocation7 + $0x40] sm:$0xf]
    %v519 = vld [vmem:[#allocation7 + $0x44] sm:$0xf]
    %v520 = vld [vmem:[#allocation7 + $0x48] sm:$0xf]
    %v521 = vld [vmem:[#allocation7 + $0x4c] sm:$0xf]
    %v522 = vld [vmem:[#allocation7 + $0x50] sm:$0xf]
    %v523 = vld [vmem:[#allocation7 + $0x54] sm:$0xf]
    %v524 = vld [vmem:[#allocation7 + $0x58] sm:$0xf]
    %v525 = vld [vmem:[#allocation7 + $0x5c] sm:$0xf]
    %v526 = vld [vmem:[#allocation7 + $0x60] sm:$0xf]
    %v527 = vld [vmem:[#allocation7 + $0x64] sm:$0xf]
    %v528 = vld [vmem:[#allocation7 + $0x68] sm:$0xf]
    %v529 = vld [vmem:[#allocation7 + $0x6c] sm:$0xf]
    %v530 = vld [vmem:[#allocation7 + $0x70] sm:$0xf]
    %v531 = vld [vmem:[#allocation7 + $0x74] sm:$0xf]
    %v532 = vld [vmem:[#allocation7 + $0x78] sm:$0xf]
    %v533 = vld [vmem:[#allocation7 + $0x7c] sm:$0xf]
    %v566 = vunpack.c.l.b16 %v502
    %v567 = vunpack.c.l.b16 %v503
    %v568 = vunpack.c.l.b16 %v504
    %v569 = vunpack.c.l.b16 %v505
    %v570 = vunpack.c.l.b16 %v506
    %v571 = vunpack.c.l.b16 %v507
    %v572 = vunpack.c.l.b16 %v508
    %v573 = vunpack.c.l.b16 %v509
    %v574 = vunpack.c.l.b16 %v510
    %v575 = vunpack.c.l.b16 %v511
    %v576 = vunpack.c.l.b16 %v512
    %v577 = vunpack.c.l.b16 %v513
    %v578 = vunpack.c.l.b16 %v514
    %v579 = vunpack.c.l.b16 %v515
    %v580 = vunpack.c.l.b16 %v516
    %v581 = vunpack.c.l.b16 %v517
    %v582 = vunpack.c.l.b16 %v518
    %v583 = vunpack.c.l.b16 %v519
    %v584 = vunpack.c.l.b16 %v520
    %v585 = vunpack.c.l.b16 %v521
    %v586 = vunpack.c.l.b16 %v522
    %v587 = vunpack.c.l.b16 %v523
    %v588 = vunpack.c.l.b16 %v524
    %v589 = vunpack.c.l.b16 %v525
    %v590 = vunpack.c.l.b16 %v526
    %v591 = vunpack.c.l.b16 %v527
    %v592 = vunpack.c.l.b16 %v528
    %v593 = vunpack.c.l.b16 %v529
    %v594 = vunpack.c.l.b16 %v530
    %v595 = vunpack.c.l.b16 %v531
    %v596 = vunpack.c.l.b16 %v532
    %v597 = vunpack.c.l.b16 %v533
    %v598 = vpack.c.b16 %v567, %v566
    %v599 = vpack.c.b16 %v569, %v568
    %v600 = vpack.c.b16 %v571, %v570
    %v601 = vpack.c.b16 %v573, %v572
    %v602 = vpack.c.b16 %v575, %v574
    %v603 = vpack.c.b16 %v577, %v576
    %v604 = vpack.c.b16 %v579, %v578
    %v605 = vpack.c.b16 %v581, %v580
    %v606 = vpack.c.b16 %v583, %v582
    %v607 = vpack.c.b16 %v585, %v584
    %v608 = vpack.c.b16 %v587, %v586
    %v609 = vpack.c.b16 %v589, %v588
    %v610 = vpack.c.b16 %v591, %v590
    %v611 = vpack.c.b16 %v593, %v592
    %v612 = vpack.c.b16 %v595, %v594
    %v613 = vpack.c.b16 %v597, %v596
    %630 = vmatprep.subr.bf16.mxu0 0
    %631 = vmatpush1.bf16.msra.mxu0 %v598
    %632 = vmatprep.subr.bf16.mxu0 0
    %633 = vmatpush1.bf16.msra.mxu0 %v599
    %634 = vmatprep.subr.bf16.mxu0 0
    %635 = vmatpush1.bf16.msra.mxu0 %v600
    %636 = vmatprep.subr.bf16.mxu0 0
    %637 = vmatpush1.bf16.msra.mxu0 %v601
    %638 = vmatprep.subr.bf16.mxu0 0
    %639 = vmatpush1.bf16.msra.mxu0 %v602
    %640 = vmatprep.subr.bf16.mxu0 0
    %641 = vmatpush1.bf16.msra.mxu0 %v603
    %642 = vmatprep.subr.bf16.mxu0 0
    %643 = vmatpush1.bf16.msra.mxu0 %v604
    %644 = vmatprep.subr.bf16.mxu0 0
    %645 = vmatpush1.bf16.msra.mxu0 %v605
    %646 = vmatprep.subr.bf16.mxu0 0
    %647 = vmatpush1.bf16.msra.mxu0 %v606
    %648 = vmatprep.subr.bf16.mxu0 0
    %649 = vmatpush1.bf16.msra.mxu0 %v607
    %650 = vmatprep.subr.bf16.mxu0 0
    %651 = vmatpush1.bf16.msra.mxu0 %v608
    %652 = vmatprep.subr.bf16.mxu0 0
    %653 = vmatpush1.bf16.msra.mxu0 %v609
    %654 = vmatprep.subr.bf16.mxu0 0
    %655 = vmatpush1.bf16.msra.mxu0 %v610
    %656 = vmatprep.subr.bf16.mxu0 0
    %657 = vmatpush1.bf16.msra.mxu0 %v611
    %658 = vmatprep.subr.bf16.mxu0 0
    %659 = vmatpush1.bf16.msra.mxu0 %v612
    %660 = vmatprep.subr.bf16.mxu0 0
    %661 = vmatpush1.bf16.msra.mxu0 %v613
    %662 = vmatprep.mubr.bf16.mxu0 %v391
    %663 = vmatmul.mubr.bf16.gmra.mrb[0].mxu0 %v390
    %v664 = vpop.f32.mrb[0].mxu0
    %v665 = vadd.f32 %v105, %v664
    %v666 = vpop.f32.mrb[0].mxu0
    %v667 = vpop.f32.mrb[0].mxu0
    %v668 = vadd.f32 %v105, %v667
    %v669 = vpop.f32.mrb[0].mxu0
    %670 = vmatprep.mubr.bf16.mxu0 %v393
    %671 = vmatmul.mubr.bf16.gmra.mrb[0].mxu0 %v392
    %v672 = vpop.f32.mrb[0].mxu0
    %v673 = vadd.f32 %v105, %v672
    %v674 = vpop.f32.mrb[0].mxu0
    %v675 = vpop.f32.mrb[0].mxu0
    %v676 = vadd.f32 %v105, %v675
    %v677 = vpop.f32.mrb[0].mxu0
    %678 = vmatprep.mubr.bf16.mxu0 %v395
    %679 = vmatmul.mubr.bf16.gmra.mrb[0].mxu0 %v394
    %v680 = vpop.f32.mrb[0].mxu0
    %v681 = vadd.f32 %v105, %v680
    %v682 = vpop.f32.mrb[0].mxu0
    %v683 = vpop.f32.mrb[0].mxu0
    %v684 = vadd.f32 %v105, %v683
    %v685 = vpop.f32.mrb[0].mxu0
    %686 = vmatprep.mubr.bf16.mxu0 %v397
    %687 = vmatmul.mubr.bf16.gmra.mrb[0].mxu0 %v396
    %v688 = vpop.f32.mrb[0].mxu0
    %v689 = vadd.f32 %v105, %v688
    %v690 = vpop.f32.mrb[0].mxu0
    %v691 = vpop.f32.mrb[0].mxu0
    %v692 = vadd.f32 %v105, %v691
    %v693 = vpop.f32.mrb[0].mxu0
    %694 = vmatprep.mubr.bf16.mxu0 %v399
    %695 = vmatmul.mubr.bf16.gmra.mrb[0].mxu0 %v398
    %v696 = vpop.f32.mrb[0].mxu0
    %v697 = vadd.f32 %v105, %v696
    %v698 = vpop.f32.mrb[0].mxu0
    %v699 = vpop.f32.mrb[0].mxu0
    %v700 = vadd.f32 %v105, %v699
    %v701 = vpop.f32.mrb[0].mxu0
    %702 = vmatprep.mubr.bf16.mxu0 %v401
    %703 = vmatmul.mubr.bf16.gmra.mrb[0].mxu0 %v400
    %v704 = vpop.f32.mrb[0].mxu0
    %v705 = vadd.f32 %v105, %v704
    %v706 = vpop.f32.mrb[0].mxu0
    %v707 = vpop.f32.mrb[0].mxu0
    %v708 = vadd.f32 %v105, %v707
    %v709 = vpop.f32.mrb[0].mxu0
    %710 = vmatprep.mubr.bf16.mxu0 %v403
    %711 = vmatmul.mubr.bf16.gmra.mrb[0].mxu0 %v402
    %v712 = vpop.f32.mrb[0].mxu0
    %v713 = vadd.f32 %v105, %v712
    %v714 = vpop.f32.mrb[0].mxu0
    %v715 = vpop.f32.mrb[0].mxu0
    %v716 = vadd.f32 %v105, %v715
    %v717 = vpop.f32.mrb[0].mxu0
    %718 = vmatprep.mubr.bf16.mxu0 %v405
    %719 = vmatmul.mubr.bf16.gmra.mrb[0].mxu0 %v404
    %v720 = vpop.f32.mrb[0].mxu0
    %v721 = vadd.f32 %v105, %v720
    %v722 = vpop.f32.mrb[0].mxu0
    %v723 = vpop.f32.mrb[0].mxu0
    %v724 = vadd.f32 %v105, %v723
    %v725 = vpop.f32.mrb[0].mxu0
    %726 = vdwg.mxu0
    %v727 = vmul.f32 %v82, %v82
    %v728 = vmul.f32 %v83, %v83
    %v729 = vmul.f32 %v84, %v84
    %v730 = vmul.f32 %v85, %v85
    %v731 = vmul.f32 %v86, %v86
    %v732 = vmul.f32 %v87, %v87
    %v733 = vmul.f32 %v88, %v88
    %v734 = vmul.f32 %v89, %v89
    %v735 = vmul.f32 %v90, %v90
    %v736 = vmul.f32 %v91, %v91
    %v737 = vmul.f32 %v92, %v92
    %v738 = vmul.f32 %v93, %v93
    %v739 = vmul.f32 %v94, %v94
    %v740 = vmul.f32 %v95, %v95
    %v741 = vmul.f32 %v96, %v96
    %v742 = vmul.f32 %v97, %v97
    %743 = vadd.xlane.f32.xlu0 %v727
    %v744 = vpop.xlane.xlu0 %743
    %745 = vadd.xlane.f32.xlu0 %v728
    %v746 = vpop.xlane.xlu0 %745
    %747 = vadd.xlane.f32.xlu0 %v729
    %v748 = vpop.xlane.xlu0 %747
    %749 = vadd.xlane.f32.xlu0 %v730
    %v750 = vpop.xlane.xlu0 %749
    %751 = vadd.xlane.f32.xlu0 %v731
    %v752 = vpop.xlane.xlu0 %751
    %753 = vadd.xlane.f32.xlu0 %v732
    %v754 = vpop.xlane.xlu0 %753
    %755 = vadd.xlane.f32.xlu0 %v733
    %v756 = vpop.xlane.xlu0 %755
    %757 = vadd.xlane.f32.xlu0 %v734
    %v758 = vpop.xlane.xlu0 %757
    %759 = vadd.xlane.f32.xlu0 %v735
    %v760 = vpop.xlane.xlu0 %759
    %761 = vadd.xlane.f32.xlu0 %v736
    %v762 = vpop.xlane.xlu0 %761
    %763 = vadd.xlane.f32.xlu0 %v737
    %v764 = vpop.xlane.xlu0 %763
    %765 = vadd.xlane.f32.xlu0 %v738
    %v766 = vpop.xlane.xlu0 %765
    %767 = vadd.xlane.f32.xlu0 %v739
    %v768 = vpop.xlane.xlu0 %767
    %769 = vadd.xlane.f32.xlu0 %v740
    %v770 = vpop.xlane.xlu0 %769
    %771 = vadd.xlane.f32.xlu0 %v741
    %v772 = vpop.xlane.xlu0 %771
    %773 = vadd.xlane.f32.xlu0 %v742
    %v774 = vpop.xlane.xlu0 %773
    %v775 = vand.u32 2147483647, %v358
    %v776 = vand.u32 2147483647, %v359
    %v777 = vand.u32 2147483647, %v360
    %v778 = vand.u32 2147483647, %v361
    %v779 = vand.u32 2147483647, %v362
    %v780 = vand.u32 2147483647, %v363
    %v781 = vand.u32 2147483647, %v364
    %v782 = vand.u32 2147483647, %v365
    %v783 = vand.u32 2147483647, %v366
    %v784 = vand.u32 2147483647, %v367
    %v785 = vand.u32 2147483647, %v368
    %v786 = vand.u32 2147483647, %v369
    %v787 = vand.u32 2147483647, %v370
    %v788 = vand.u32 2147483647, %v371
    %v789 = vand.u32 2147483647, %v372
    %v790 = vand.u32 2147483647, %v373
    %v791 = vand.u32 2147483647, %v374
    %v792 = vand.u32 2147483647, %v375
    %v793 = vand.u32 2147483647, %v376
    %v794 = vand.u32 2147483647, %v377
    %v795 = vand.u32 2147483647, %v378
    %v796 = vand.u32 2147483647, %v379
    %v797 = vand.u32 2147483647, %v380
    %v798 = vand.u32 2147483647, %v381
    %v799 = vand.u32 2147483647, %v382
    %v800 = vand.u32 2147483647, %v383
    %v801 = vand.u32 2147483647, %v384
    %v802 = vand.u32 2147483647, %v385
    %v803 = vand.u32 2147483647, %v386
    %v804 = vand.u32 2147483647, %v387
    %v805 = vand.u32 2147483647, %v388
    %v806 = vand.u32 2147483647, %v389
    %v807 = vadd.f32 %v775, %v776
    %808 = vadd.xlane.f32.xlu0 %v807
    %v809 = vpop.xlane.xlu0 %808
    %v810 = vadd.f32 %v777, %v778
    %811 = vadd.xlane.f32.xlu0 %v810
    %v812 = vpop.xlane.xlu0 %811
    %v813 = vadd.f32 %v779, %v780
    %814 = vadd.xlane.f32.xlu0 %v813
    %v815 = vpop.xlane.xlu0 %814
    %v816 = vadd.f32 %v781, %v782
    %817 = vadd.xlane.f32.xlu0 %v816
    %v818 = vpop.xlane.xlu0 %817
    %v819 = vadd.f32 %v783, %v784
    %820 = vadd.xlane.f32.xlu0 %v819
    %v821 = vpop.xlane.xlu0 %820
    %v822 = vadd.f32 %v785, %v786
    %823 = vadd.xlane.f32.xlu0 %v822
    %v824 = vpop.xlane.xlu0 %823
    %v825 = vadd.f32 %v787, %v788
    %826 = vadd.xlane.f32.xlu0 %v825
    %v827 = vpop.xlane.xlu0 %826
    %v828 = vadd.f32 %v789, %v790
    %829 = vadd.xlane.f32.xlu0 %v828
    %v830 = vpop.xlane.xlu0 %829
    %v831 = vadd.f32 %v791, %v792
    %832 = vadd.xlane.f32.xlu0 %v831
    %v833 = vpop.xlane.xlu0 %832
    %v834 = vadd.f32 %v793, %v794
    %835 = vadd.xlane.f32.xlu0 %v834
    %v836 = vpop.xlane.xlu0 %835
    %v837 = vadd.f32 %v795, %v796
    %838 = vadd.xlane.f32.xlu0 %v837
    %v839 = vpop.xlane.xlu0 %838
    %v840 = vadd.f32 %v797, %v798
    %841 = vadd.xlane.f32.xlu0 %v840
    %v842 = vpop.xlane.xlu0 %841
    %v843 = vadd.f32 %v799, %v800
    %844 = vadd.xlane.f32.xlu0 %v843
    %v845 = vpop.xlane.xlu0 %844
    %v846 = vadd.f32 %v801, %v802
    %847 = vadd.xlane.f32.xlu0 %v846
    %v848 = vpop.xlane.xlu0 %847
    %v849 = vadd.f32 %v803, %v804
    %850 = vadd.xlane.f32.xlu0 %v849
    %v851 = vpop.xlane.xlu0 %850
    %v852 = vadd.f32 %v805, %v806
    %853 = vadd.xlane.f32.xlu0 %v852
    %v854 = vpop.xlane.xlu0 %853
    %v855 = vrsqrt.pop %v744
    %v856 = vrsqrt.pop %v746
    %v857 = vrsqrt.pop %v748
    %v858 = vrsqrt.pop %v750
    %v859 = vrsqrt.pop %v752
    %v860 = vrsqrt.pop %v754
    %v861 = vrsqrt.pop %v756
    %v862 = vrsqrt.pop %v758
    %v863 = vrsqrt.pop %v760
    %v864 = vrsqrt.pop %v762
    %v865 = vrsqrt.pop %v764
    %v866 = vrsqrt.pop %v766
    %v867 = vrsqrt.pop %v768
    %v868 = vrsqrt.pop %v770
    %v869 = vrsqrt.pop %v772
    %v870 = vrsqrt.pop %v774
    %v871 = vmul.f32 %v809, %v855
    %v872 = vmul.f32 %v812, %v856
    %v873 = vmul.f32 %v815, %v857
    %v874 = vmul.f32 %v818, %v858
    %v875 = vmul.f32 %v821, %v859
    %v876 = vmul.f32 %v824, %v860
    %v877 = vmul.f32 %v827, %v861
    %v878 = vmul.f32 %v830, %v862
    %v879 = vmul.f32 %v833, %v863
    %v880 = vmul.f32 %v836, %v864
    %v881 = vmul.f32 %v839, %v865
    %v882 = vmul.f32 %v842, %v866
    %v883 = vmul.f32 %v845, %v867
    %v884 = vmul.f32 %v848, %v868
    %v885 = vmul.f32 %v851, %v869
    %v886 = vmul.f32 %v854, %v870
    %vm887 = vcmask 7168
    %888 = vst.msk [vmem:[%s6] sm:$0xff] %vm887, %v871
    %889 = vst.msk [vmem:[%s6 + $0x8] sm:$0xff] %vm887, %v872
    %890 = vst.msk [vmem:[%s6 + $0x10] sm:$0xff] %vm887, %v873
    %891 = vst.msk [vmem:[%s6 + $0x18] sm:$0xff] %vm887, %v874
    %892 = vst.msk [vmem:[%s6 + $0x20] sm:$0xff] %vm887, %v875
    %893 = vst.msk [vmem:[%s6 + $0x28] sm:$0xff] %vm887, %v876
    %894 = vst.msk [vmem:[%s6 + $0x30] sm:$0xff] %vm887, %v877
    %895 = vst.msk [vmem:[%s6 + $0x38] sm:$0xff] %vm887, %v878
    %896 = vst.msk [vmem:[%s6 + $0x40] sm:$0xff] %vm887, %v879
    %897 = vst.msk [vmem:[%s6 + $0x48] sm:$0xff] %vm887, %v880
    %898 = vst.msk [vmem:[%s6 + $0x50] sm:$0xff] %vm887, %v881
    %899 = vst.msk [vmem:[%s6 + $0x58] sm:$0xff] %vm887, %v882
    %900 = vst.msk [vmem:[%s6 + $0x60] sm:$0xff] %vm887, %v883
    %901 = vst.msk [vmem:[%s6 + $0x68] sm:$0xff] %vm887, %v884
    %902 = vst.msk [vmem:[%s6 + $0x70] sm:$0xff] %vm887, %v885
    %903 = vst.msk [vmem:[%s6 + $0x78] sm:$0xff] %vm887, %v886
    %v904 = vsub.f32 %v82, %v665
    %v905 = vsub.f32 %v83, %v668
    %v906 = vsub.f32 %v84, %v673
    %v907 = vsub.f32 %v85, %v676
    %v908 = vsub.f32 %v86, %v681
    %v909 = vsub.f32 %v87, %v684
    %v910 = vsub.f32 %v88, %v689
    %v911 = vsub.f32 %v89, %v692
    %v912 = vsub.f32 %v90, %v697
    %v913 = vsub.f32 %v91, %v700
    %v914 = vsub.f32 %v92, %v705
    %v915 = vsub.f32 %v93, %v708
    %v916 = vsub.f32 %v94, %v713
    %v917 = vsub.f32 %v95, %v716
    %v918 = vsub.f32 %v96, %v721
    %v919 = vsub.f32 %v97, %v724
    %v920 = vmul.f32 %v904, %v904
    %v921 = vmul.f32 %v905, %v905
    %v922 = vmul.f32 %v906, %v906
    %v923 = vmul.f32 %v907, %v907
    %v924 = vmul.f32 %v908, %v908
    %v925 = vmul.f32 %v909, %v909
    %v926 = vmul.f32 %v910, %v910
    %v927 = vmul.f32 %v911, %v911
    %v928 = vmul.f32 %v912, %v912
    %v929 = vmul.f32 %v913, %v913
    %v930 = vmul.f32 %v914, %v914
    %v931 = vmul.f32 %v915, %v915
    %v932 = vmul.f32 %v916, %v916
    %v933 = vmul.f32 %v917, %v917
    %v934 = vmul.f32 %v918, %v918
    %v935 = vmul.f32 %v919, %v919
    %936 = vadd.xlane.f32.xlu0 %v920
    %v937 = vpop.xlane.xlu0 %936
    %938 = vadd.xlane.f32.xlu0 %v921
    %v939 = vpop.xlane.xlu0 %938
    %940 = vadd.xlane.f32.xlu0 %v922
    %v941 = vpop.xlane.xlu0 %940
    %942 = vadd.xlane.f32.xlu0 %v923
    %v943 = vpop.xlane.xlu0 %942
    %944 = vadd.xlane.f32.xlu0 %v924
    %v945 = vpop.xlane.xlu0 %944
    %946 = vadd.xlane.f32.xlu0 %v925
    %v947 = vpop.xlane.xlu0 %946
    %948 = vadd.xlane.f32.xlu0 %v926
    %v949 = vpop.xlane.xlu0 %948
    %950 = vadd.xlane.f32.xlu0 %v927
    %v951 = vpop.xlane.xlu0 %950
    %952 = vadd.xlane.f32.xlu0 %v928
    %v953 = vpop.xlane.xlu0 %952
    %954 = vadd.xlane.f32.xlu0 %v929
    %v955 = vpop.xlane.xlu0 %954
    %956 = vadd.xlane.f32.xlu0 %v930
    %v957 = vpop.xlane.xlu0 %956
    %958 = vadd.xlane.f32.xlu0 %v931
    %v959 = vpop.xlane.xlu0 %958
    %960 = vadd.xlane.f32.xlu0 %v932
    %v961 = vpop.xlane.xlu0 %960
    %962 = vadd.xlane.f32.xlu0 %v933
    %v963 = vpop.xlane.xlu0 %962
    %964 = vadd.xlane.f32.xlu0 %v934
    %v965 = vpop.xlane.xlu0 %964
    %966 = vadd.xlane.f32.xlu0 %v935
    %v967 = vpop.xlane.xlu0 %966
    %v968 = vrcp.pop %v744
    %v969 = vrcp.pop %v746
    %v970 = vrcp.pop %v748
    %v971 = vrcp.pop %v750
    %v972 = vrcp.pop %v752
    %v973 = vrcp.pop %v754
    %v974 = vrcp.pop %v756
    %v975 = vrcp.pop %v758
    %v976 = vrcp.pop %v760
    %v977 = vrcp.pop %v762
    %v978 = vrcp.pop %v764
    %v979 = vrcp.pop %v766
    %v980 = vrcp.pop %v768
    %v981 = vrcp.pop %v770
    %v982 = vrcp.pop %v772
    %v983 = vrcp.pop %v774
    %v984 = vmul.f32 %v937, %v968
    %v985 = vmul.f32 %v939, %v969
    %v986 = vmul.f32 %v941, %v970
    %v987 = vmul.f32 %v943, %v971
    %v988 = vmul.f32 %v945, %v972
    %v989 = vmul.f32 %v947, %v973
    %v990 = vmul.f32 %v949, %v974
    %v991 = vmul.f32 %v951, %v975
    %v992 = vmul.f32 %v953, %v976
    %v993 = vmul.f32 %v955, %v977
    %v994 = vmul.f32 %v957, %v978
    %v995 = vmul.f32 %v959, %v979
    %v996 = vmul.f32 %v961, %v980
    %v997 = vmul.f32 %v963, %v981
    %v998 = vmul.f32 %v965, %v982
    %v999 = vmul.f32 %v967, %v983
    %1000 = vst.msk [vmem:[%s7] sm:$0xff] %vm887, %v984
    %1001 = vst.msk [vmem:[%s7 + $0x8] sm:$0xff] %vm887, %v985
    %1002 = vst.msk [vmem:[%s7 + $0x10] sm:$0xff] %vm887, %v986
    %1003 = vst.msk [vmem:[%s7 + $0x18] sm:$0xff] %vm887, %v987
    %1004 = vst.msk [vmem:[%s7 + $0x20] sm:$0xff] %vm887, %v988
    %1005 = vst.msk [vmem:[%s7 + $0x28] sm:$0xff] %vm887, %v989
    %1006 = vst.msk [vmem:[%s7 + $0x30] sm:$0xff] %vm887, %v990
    %1007 = vst.msk [vmem:[%s7 + $0x38] sm:$0xff] %vm887, %v991
    %1008 = vst.msk [vmem:[%s7 + $0x40] sm:$0xff] %vm887, %v992
    %1009 = vst.msk [vmem:[%s7 + $0x48] sm:$0xff] %vm887, %v993
    %1010 = vst.msk [vmem:[%s7 + $0x50] sm:$0xff] %vm887, %v994
    %1011 = vst.msk [vmem:[%s7 + $0x58] sm:$0xff] %vm887, %v995
    %1012 = vst.msk [vmem:[%s7 + $0x60] sm:$0xff] %vm887, %v996
    %1013 = vst.msk [vmem:[%s7 + $0x68] sm:$0xff] %vm887, %v997
    %1014 = vst.msk [vmem:[%s7 + $0x70] sm:$0xff] %vm887, %v998
    %1015 = vst.msk [vmem:[%s7 + $0x78] sm:$0xff] %vm887, %v999
    // Predicated region
    $region34: #{tpu_custom_call.1} parent=1 // pred_check
      _
    $region35: #{tpu_custom_call.1} parent=1 // pred_check_branch
      %1017 = sbr.rel (0) target = $region37
    $region36: #{tpu_custom_call.1} parent=1 // pred_region
      %s1019 = ssub.s32 2048, 2048
      %1020 = vsyncadd [#allocation4], %s1019
      %s1021 = sshll.u32 [#allocation8], 4
      %s1022 = int_to_ptr.vmem [resolvable:$true] %s1021
      %1027 = dma.vmem_to_hbm [thread:$0]  %s1022, 2048, %s5, [#allocation4], 128, 128, 8
    $region37: #{tpu_custom_call.1} parent=1 // pred_fallthru
      _
    // Predicated region
    $region38: #{tpu_custom_call.1} parent=1 // pred_check
      _
    $region39: #{tpu_custom_call.1} parent=1 // pred_check_branch
      %1029 = sbr.rel (0) target = $region41
    $region40: #{tpu_custom_call.1} parent=1 // pred_region
      _
    $region41: #{tpu_custom_call.1} parent=1 // pred_fallthru
      _
    // Predicated region
    $region42: #{tpu_custom_call.1} parent=1 // pred_check
      _
    $region43: #{tpu_custom_call.1} parent=1 // pred_check_branch
      %1031 = sbr.rel (0) target = $region45
    $region44: #{tpu_custom_call.1} parent=1 // pred_region
      _
    $region45: #{tpu_custom_call.1} parent=1 // pred_fallthru
      _
    // Predicated region
    $region46: #{tpu_custom_call.1} parent=1 // pred_check
      _
    $region47: #{tpu_custom_call.1} parent=1 // pred_check_branch
      %1033 = sbr.rel (0) target = $region49
    $region48: #{tpu_custom_call.1} parent=1 // pred_region
      %1034 = dma.done [#allocation4], 2048
    $region49: #{tpu_custom_call.1} parent=1 // pred_fallthru
      _
    // Predicated region
    $region50: #{tpu_custom_call.1} parent=1 // pred_check
      _
    $region51: #{tpu_custom_call.1} parent=1 // pred_check_branch
      %1036 = sbr.rel (0) target = $region53
    $region52: #{tpu_custom_call.1} parent=1 // pred_region
      _
    $region53: #{tpu_custom_call.1} parent=1 // pred_fallthru
      _
    // Predicated region
    $region54: #{tpu_custom_call.1} parent=1 // pred_check
      _
    $region55: #{tpu_custom_call.1} parent=1 // pred_check_branch
      %1038 = sbr.rel (0) target = $region57
    $region56: #{tpu_custom_call.1} parent=1 // pred_region
      _
    $region57: #{tpu_custom_call.1} parent=1 // pred_fallthru
      _
    %1039 = vsyncpa [#allocation3], 1
    %1040 = vsyncpa [#allocation6], 1
    %1041 = vsyncpa [#allocation4], 1

</llo_original>
